<compile_context>
chip_gen: v5e
topology: v5e:2x2
jax: 0.10.0
libtpu: 0.0.40
codegen_flags: <defaults>
</compile_context>

<pallas_src>
import functools
import math

import jax
import jax.numpy as jnp
from jax.experimental import pallas as pl
from jax.experimental.pallas import tpu as pltpu


_NEG_INF = -1e30        # finite mask value: no NaN from exp(-1e30 - m)


def _default_vmem_limit():
    """Per-generation VMEM cap (v5e/v6e ~128 MiB, v7x 64 MiB) with safe fallback."""
    try:
        cap = int(pltpu.get_tpu_info().vmem_capacity_bytes)
        return max(32 * 1024 * 1024, min(cap - 16 * 1024 * 1024, int(cap * 0.8)))
    except Exception:
        return 48 * 1024 * 1024        # safe on every generation incl. v7x


_VMEM_LIMIT = _default_vmem_limit()


def _pick_tile(dim, desired, align):
    """Largest tile <= desired that divides `dim` and is `align`-aligned.

    Falls back to the full dimension (always a legal block) if the dimension
    is small or no aligned divisor exists.
    """
    if dim <= desired:
        return dim
    t = (desired // align) * align
    while t >= align:
        if dim % t == 0:
            return t
        t -= align
    return dim


# ----------------------------------------------------------------------------
# Kernel 1: fused linear  y = x @ Wt + b   (Wt already (K, N), bf16)
# ----------------------------------------------------------------------------
def _linear_kernel(x_ref, w_ref, b_ref, o_ref):
    acc = jnp.dot(x_ref[...], w_ref[...], preferred_element_type=jnp.float32)
    o_ref[...] = (acc + b_ref[...].astype(jnp.float32)).astype(o_ref.dtype)


def _linear_vmem_bytes(tm, tn, K, out_bytes):
    # double-buffered x (bf16), w (bf16), bias (f32) and out tiles
    return 2 * (tm * K * 2 + K * tn * 2 + tn * 4 + tm * tn * out_bytes)


def _linear(x2d, w_t, b, *, out_dtype, tm_desired=512, tn_desired=2048):
    """x2d: (M, K) bf16, w_t: (K, N) bf16, b: (N,) f32 -> (M, N) out_dtype."""
    x2d = x2d.astype(jnp.bfloat16)
    w_t = w_t.astype(jnp.bfloat16)
    M, K = x2d.shape
    _, N = w_t.shape

    tm = _pick_tile(M, tm_desired, 8)        # sublane dim: mult of 8 (or full)
    tn = _pick_tile(N, tn_desired, 128)      # lane dim: mult of 128 (or full)

    # Shrink tiles if the double-buffered footprint exceeds the per-gen budget
    # (matters for large C on v7x's 64 MiB; no-op for nanoGPT-scale shapes).
    budget = _VMEM_LIMIT // 2
    out_bytes = jnp.dtype(out_dtype).itemsize
    for _ in range(16):
        if _linear_vmem_bytes(tm, tn, K, out_bytes) <= budget:
            break
        if tn > 128:
            new_tn = _pick_tile(N, max(tn // 2, 128), 128)
            if new_tn < tn:
                tn = new_tn
                continue
        if tm > 8:
            new_tm = _pick_tile(M, max(tm // 2, 8), 8)
            if new_tm < tm:
                tm = new_tm
                continue
        break

    return pl.pallas_call(
        _linear_kernel,
        out_shape=jax.ShapeDtypeStruct((M, N), out_dtype),
        grid=(M // tm, N // tn),
        in_specs=[
            pl.BlockSpec((tm, K), lambda i, j: (i, 0)),     # K untiled: one dot
            pl.BlockSpec((K, tn), lambda i, j: (0, j)),
            pl.BlockSpec((1, tn), lambda i, j: (0, j)),
        ],
        out_specs=pl.BlockSpec((tm, tn), lambda i, j: (i, j)),
        compiler_params=pltpu.CompilerParams(
            dimension_semantics=("parallel", "parallel"),
            vmem_limit_bytes=_VMEM_LIMIT,
        ),
    )(x2d, w_t, b.reshape(1, N))


# ----------------------------------------------------------------------------
# Kernel 2: flash-style causal attention over a triangular (qi, ki) pair grid
# ----------------------------------------------------------------------------
def _flash_attn_kernel(qi_tbl, ki_tbl, q_ref, k_ref, v_ref, o_ref,
                       m_ref, l_ref, acc_ref, qs_ref, *, scale):
    p = pl.program_id(2)
    qi = qi_tbl[p]
    ki = ki_tbl[p]

    @pl.when(ki == 0)
    def _init():
        m_ref[...] = jnp.full_like(m_ref, -jnp.inf)
        l_ref[...] = jnp.zeros_like(l_ref)
        acc_ref[...] = jnp.zeros_like(acc_ref)
        # hoist q * scale + bf16 cast out of the kv loop (reused for all ki)
        qs_ref[...] = (q_ref[...].astype(jnp.float32) * scale).astype(jnp.bfloat16)

    # scores for this (q tile, kv tile): (tq, tkv) in f32
    s = jax.lax.dot_general(qs_ref[...], k_ref[...],
                            (((1,), (1,)), ((), ())),
                            preferred_element_type=jnp.float32)
    v = v_ref[...]

    def _update(scores):
        m_prev = m_ref[...]
        m_new = jnp.maximum(m_prev, jnp.max(scores, axis=-1, keepdims=True))
        alpha = jnp.exp(m_prev - m_new)
        probs = jnp.exp(scores - m_new)
        l_ref[...] = alpha * l_ref[...] + jnp.sum(probs, axis=-1, keepdims=True)
        acc_ref[...] = alpha * acc_ref[...] + jnp.dot(
            probs.astype(jnp.bfloat16), v, preferred_element_type=jnp.float32)
        m_ref[...] = m_new

    @pl.when(ki < qi)            # fully unmasked tile: no iota/where work
    def _off_diag():
        _update(s)

    @pl.when(ki == qi)           # diagonal tile == last kv step for this q tile
    def _diag_and_finalize():
        row = jax.lax.broadcasted_iota(jnp.int32, s.shape, 0)
        col = jax.lax.broadcasted_iota(jnp.int32, s.shape, 1)
        _update(jnp.where(col <= row, s, _NEG_INF))
        inv_l = pl.reciprocal(l_ref[...], approx=True)
        o_ref[...] = (acc_ref[...] * inv_l).astype(o_ref.dtype)


def _flash_attention(q, k, v, *, block_q=512):
    """q, k, v: (B, n_head, T, head_dim) bf16 -> (B, n_head, T, head_dim) bf16."""
    q = q.astype(jnp.bfloat16)
    k = k.astype(jnp.bfloat16)
    v = v.astype(jnp.bfloat16)
    B, H, T, D = q.shape
    tq = _pick_tile(T, block_q, 8)
    tkv = tq                              # equal tiles -> diagonal == (ki == qi)
    nq = T // tq
    scale = 1.0 / math.sqrt(D)

    # Triangular enumeration of (qi, ki) pairs (ki ascending per qi) removes
    # all fully-masked grid steps; tables are scalar-prefetched into SMEM.
    qi_list, ki_list = [], []
    for qq in range(nq):
        for kk in range(qq + 1):
            qi_list.append(qq)
            ki_list.append(kk)
    qi_tbl = jnp.asarray(qi_list, dtype=jnp.int32)
    ki_tbl = jnp.asarray(ki_list, dtype=jnp.int32)
    n_pairs = len(qi_list)

    q_spec = pl.BlockSpec((None, None, tq, D),
                          lambda b, h, p, qi_t, ki_t: (b, h, qi_t[p], 0))
    kv_spec = pl.BlockSpec((None, None, tkv, D),
                           lambda b, h, p, qi_t, ki_t: (b, h, ki_t[p], 0))
    o_spec = pl.BlockSpec((None, None, tq, D),
                          lambda b, h, p, qi_t, ki_t: (b, h, qi_t[p], 0))

    kernel = functools.partial(_flash_attn_kernel, scale=scale)

    return pl.pallas_call(
        kernel,
        out_shape=jax.ShapeDtypeStruct((B, H, T, D), q.dtype),
        grid_spec=pltpu.PrefetchScalarGridSpec(
            num_scalar_prefetch=2,
            grid=(B, H, n_pairs),
            in_specs=[q_spec, kv_spec, kv_spec],
            out_specs=o_spec,
            scratch_shapes=[
                pltpu.VMEM((tq, 1), jnp.float32),    # running max m
                pltpu.VMEM((tq, 1), jnp.float32),    # running sum l
                pltpu.VMEM((tq, D), jnp.float32),    # output accumulator
                pltpu.VMEM((tq, D), jnp.bfloat16),   # pre-scaled q tile
            ]),
        compiler_params=pltpu.CompilerParams(
            dimension_semantics=("parallel", "parallel", "arbitrary"),
            vmem_limit_bytes=_VMEM_LIMIT,
        ),
    )(qi_tbl, ki_tbl, q, k, v)


# ----------------------------------------------------------------------------
# Module forward: CausalSelfAttention
# ----------------------------------------------------------------------------
def causal_self_attention(x, w_attn, b_attn, w_proj, b_proj, n_head, *,
                          attn_block_q=512):
    """x: (B, T, C); w_attn: (3C, C); b_attn: (3C,); w_proj: (C, C); b_proj: (C,)."""
    B, T, C = x.shape
    hd = C // n_head

    # One-time weight prep: bf16 + (in, out) layout.  In a real model this is
    # done at parameter-load time, not per forward call.
    w_attn_t = w_attn.astype(jnp.bfloat16).T        # (C, 3C)
    w_proj_t = w_proj.astype(jnp.bfloat16).T        # (C, C)

    # qkv = x @ W_attn^T + b_attn   (single-dot Pallas matmul, bf16 out)
    x_bf = x.astype(jnp.bfloat16).reshape(B * T, C)
    qkv = _linear(x_bf, w_attn_t, b_attn, out_dtype=jnp.bfloat16)   # (B*T, 3C)
    qkv = qkv.reshape(B, T, 3, n_head, hd)

    # TODO(synk): fold these head-split/merge transposes into the attention
    # BlockSpecs once a heads-minor (B, T, 3, H, hd) slab block is expressible
    # without violating the (8,128) second-minor block constraint; they are
    # bf16 now, so the remaining HBM cost is half of the previous version.
    q = qkv[:, :, 0].transpose(0, 2, 1, 3)                          # (B, H, T, hd)
    k = qkv[:, :, 1].transpose(0, 2, 1, 3)
    v = qkv[:, :, 2].transpose(0, 2, 1, 3)

    # flash-style causal attention over the triangular tile grid (bf16 out)
    y = _flash_attention(q, k, v, block_q=attn_block_q)             # (B, H, T, hd)

    # merge heads and apply output projection (f32 final output)
    y = y.transpose(0, 2, 1, 3).reshape(B * T, C)
    y = _linear(y, w_proj_t, b_proj, out_dtype=jnp.float32)
    return y.reshape(B, T, C)


# ----------------------------------------------------------------------------
# Pure-JAX reference for validation
# ----------------------------------------------------------------------------
def _reference(x, w_attn, b_attn, w_proj, b_proj, n_head):
    B, T, C = x.shape
    hd = C // n_head
    qkv = x @ w_attn.T + b_attn
    q, k, v = jnp.split(qkv, 3, axis=2)
    q = q.reshape(B, T, n_head, hd).transpose(0, 2, 1, 3)
    k = k.reshape(B, T, n_head, hd).transpose(0, 2, 1, 3)
    v = v.reshape(B, T, n_head, hd).transpose(0, 2, 1, 3)
    s = jnp.einsum("bhqd,bhkd->bhqk", q, k) / math.sqrt(hd)
    mask = jnp.tril(jnp.ones((T, T), dtype=bool))
    s = jnp.where(mask, s, -jnp.inf)
    p = jax.nn.softmax(s, axis=-1)
    y = jnp.einsum("bhqk,bhkd->bhqd", p, v)
    y = y.transpose(0, 2, 1, 3).reshape(B, T, C)
    return y @ w_proj.T + b_proj


if __name__ == "__main__":
    # Small config consistent with the module: n_embd=32, n_head=4 (head_dim=8),
    # T=16, B=2.  attn_block_q=8 gives nq=2 -> 3 triangular (qi, ki) pairs per
    # (batch, head), exercising init / off-diagonal / diagonal+finalize paths
    # and the scalar-prefetched pair tables.
    Bv, Tv, n_head, C = 2, 16, 4, 32

    key = jax.random.PRNGKey(0)
    k1, k2, k3, k4, k5 = jax.random.split(key, 5)
    x = jax.random.normal(k1, (Bv, Tv, C), dtype=jnp.float32)
    w_attn = jax.random.normal(k2, (3 * C, C), dtype=jnp.float32) * 0.02
    b_attn = jax.random.normal(k3, (3 * C,), dtype=jnp.float32) * 0.02
    w_proj = jax.random.normal(k4, (C, C), dtype=jnp.float32) * 0.02
    b_proj = jax.random.normal(k5, (C,), dtype=jnp.float32) * 0.02

    y = causal_self_attention(x, w_attn, b_attn, w_proj, b_proj, n_head,
                              attn_block_q=8)
    y = jax.block_until_ready(y)

    y_ref = _reference(x, w_attn, b_attn, w_proj, b_proj, n_head)
    assert y.shape == (Bv, Tv, C)
    # bf16 activations + approximate reciprocal -> compare with relaxed tolerance
    assert jnp.allclose(y, y_ref, atol=2e-2, rtol=2e-2), "mismatch vs reference"

    print("KERNEL_OK")
</pallas_src>

<mosaic_0001>
module attributes {stable_mosaic.version = 11 : i64} {
  func.func @_linear_kernel(%arg0: i32, %arg1: i32, %arg2: memref<32x32xbf16, #tpu.memory_space<vmem>>, %arg3: memref<32x96xbf16, #tpu.memory_space<vmem>>, %arg4: memref<1x96xf32, #tpu.memory_space<vmem>>, %arg5: memref<32x96xbf16, #tpu.memory_space<vmem>>) attributes {dimension_semantics = [#tpu.dimension_semantics<parallel>, #tpu.dimension_semantics<parallel>], iteration_bounds = array<i64: 1, 1>, scalar_prefetch = 0 : i64, scratch_operands = 0 : i64, tpu.core_type = #tpu.core_type<tc>, window_params = [{transform_indices = @transform_0, window_bounds = array<i64: 32, 32>}, {transform_indices = @transform_1, window_bounds = array<i64: 32, 96>}, {transform_indices = @transform_2, window_bounds = array<i64: 1, 96>}, {transform_indices = @transform_3, window_bounds = array<i64: 32, 96>}]} {
    %c0 = arith.constant 0 : index
    %c0_0 = arith.constant 0 : index
    %0 = vector.load %arg2[%c0, %c0_0] : memref<32x32xbf16, #tpu.memory_space<vmem>>, vector<32x32xbf16>
    %c0_1 = arith.constant 0 : index
    %c0_2 = arith.constant 0 : index
    %1 = vector.load %arg3[%c0_1, %c0_2] : memref<32x96xbf16, #tpu.memory_space<vmem>>, vector<32x96xbf16>
    %cst = arith.constant dense<0.000000e+00> : vector<32x96xf32>
    %2 = tpu.matmul %0, %1, %cst {dimension_numbers = #tpu.dot_dimension_numbers<[1], [0], [0], [1], [0, 0, 1, 1], [], []>} : vector<32x32xbf16>, vector<32x96xbf16>, vector<32x96xf32> -> vector<32x96xf32>
    %c0_3 = arith.constant 0 : index
    %c0_4 = arith.constant 0 : index
    %3 = vector.load %arg4[%c0_3, %c0_4] : memref<1x96xf32, #tpu.memory_space<vmem>>, vector<1x96xf32>
    %4 = vector.broadcast %3 : vector<1x96xf32> to vector<32x96xf32>
    %5 = arith.addf %2, %4 : vector<32x96xf32>
    %6 = arith.truncf %5 : vector<32x96xf32> to vector<32x96xbf16>
    %c0_5 = arith.constant 0 : index
    %c0_6 = arith.constant 0 : index
    %7 = vector.load %arg5[%c0_5, %c0_6] : memref<32x96xbf16, #tpu.memory_space<vmem>>, vector<32x96xbf16>
    tpu.vector_store %arg5[%c0_5, %c0_6], %6 {strides = array<i32>} : memref<32x96xbf16, #tpu.memory_space<vmem>>, vector<32x96xbf16>,
    return
  }
  func.func @transform_0(%arg0: i32, %arg1: i32) -> (i32, i32) {
    %c0_i32 = arith.constant 0 : i32
    %c0_i32_0 = arith.constant 0 : i32
    return %arg0, %c0_i32 : i32, i32
  }
  func.func @transform_1(%arg0: i32, %arg1: i32) -> (i32, i32) {
    %c0_i32 = arith.constant 0 : i32
    %c0_i32_0 = arith.constant 0 : i32
    return %c0_i32, %arg1 : i32, i32
  }
  func.func @transform_2(%arg0: i32, %arg1: i32) -> (i32, i32) {
    %c0_i32 = arith.constant 0 : i32
    %c0_i32_0 = arith.constant 0 : i32
    return %c0_i32, %arg1 : i32, i32
  }
  func.func @transform_3(%arg0: i32, %arg1: i32) -> (i32, i32) {
    %c0_i32 = arith.constant 0 : i32
    return %arg0, %arg1 : i32, i32
  }
}

</mosaic_0001>

<llo_original>
// kernel: tpu_custom_call.1
$region0: #{tpu_custom_call.1}
  #allocation0 [shape = 'u32[]', space=smem, size = 0x4, offset = 0x4, fixed_abs, tag = 'smem constant byte address 0x4 - core index']
  #allocation1 [shape = 'u32[72,128]{1,0:T(1,128)}', space=vmem, size = 0x9000, scoped, tag = 'internal scratch']
  %s0 = inlined_call_operand.hbm [shape: bf16[32,32], index: 0, kind: input, shape index: {}]
  %s1 = inlined_call_operand.hbm [shape: bf16[32,96], index: 1, kind: input, shape index: {}]
  %s2 = inlined_call_operand.vmem [shape: f32[1,96], index: 2, kind: input, shape index: {}]
  %s3 = inlined_call_operand.hbm [shape: bf16[32,96], index: 3, kind: output, shape index: {}]
  %s4 = sld [smem:[#allocation0]]
  $region30: #{tpu_custom_call.1} parent=0
    _
  %s6 = ssub.s32 1, %s4
  %s7 = scalar_select 0, %s6, %s4
  $region1: #{tpu_custom_call.1} parent=0
    #allocation2 [shape = 'u8[8192]{0}', space=vmem, size = 0x2000, scoped, tag = 'input window, operand 0, single buffered']
    #allocation3 [shape = 's32[1]{0}', space=sflag, size = 0x4, scoped, tag = 'scoped memory for tpu_custom_call.1']
    #allocation4 [shape = 's32[1]{0}', space=sflag, size = 0x4, scoped, tag = 'scoped memory for tpu_custom_call.1']
    #allocation5 [shape = 'u8[8192]{0}', space=vmem, size = 0x2000, scoped, tag = 'input window, operand 1, single buffered']
    #allocation6 [shape = 's32[1]{0}', space=sflag, size = 0x4, scoped, tag = 'scoped memory for tpu_custom_call.1']
    #allocation7 [shape = 'u8[8192]{0}', space=vmem, size = 0x2000, scoped, tag = 'output window, operand 0, single buffered']
    %8 = vsyncpa [#allocation3], 0
    %9 = vsyncpa [#allocation6], 0
    %10 = vsyncpa [#allocation4], 0
    // Predicated region
    $region2: #{tpu_custom_call.1} parent=1 // pred_check
      _
    $region3: #{tpu_custom_call.1} parent=1 // pred_check_branch
      %12 = sbr.rel (0) target = $region5
    $region4: #{tpu_custom_call.1} parent=1 // pred_region
      %14 = vsyncadd [#allocation3], 0
      %s15 = sshll.u32 %s0, 4
      %s16 = int_to_ptr.hbm [resolvable:$true] %s15
      %s17 = sshll.u32 [#allocation2], 4
      %s18 = int_to_ptr.vmem [resolvable:$true] %s17
      %23 = dma.hbm_to_vmem [thread:$0]  %s16, 256, %s18, [#allocation3], 64, 64, 4
    $region5: #{tpu_custom_call.1} parent=1 // pred_fallthru
      _
    // Predicated region
    $region6: #{tpu_custom_call.1} parent=1 // pred_check
      _
    $region7: #{tpu_custom_call.1} parent=1 // pred_check_branch
      %25 = sbr.rel (0) target = $region9
    $region8: #{tpu_custom_call.1} parent=1 // pred_region
      %27 = vsyncadd [#allocation6], 0
      %s28 = sshll.u32 %s1, 4
      %s29 = int_to_ptr.hbm [resolvable:$true] %s28
      %s30 = sshll.u32 [#allocation5], 4
      %s31 = int_to_ptr.vmem [resolvable:$true] %s30
      %36 = dma.hbm_to_vmem [thread:$0]  %s29, 256, %s31, [#allocation6], 64, 64, 4
    $region9: #{tpu_custom_call.1} parent=1 // pred_fallthru
      _
    // Predicated region
    $region10: #{tpu_custom_call.1} parent=1 // pred_check
      _
    $region11: #{tpu_custom_call.1} parent=1 // pred_check_branch
      %38 = sbr.rel (0) target = $region13
    $region12: #{tpu_custom_call.1} parent=1 // pred_region
      _
    $region13: #{tpu_custom_call.1} parent=1 // pred_fallthru
      _
    // Predicated region
    $region14: #{tpu_custom_call.1} parent=1 // pred_check
      _
    $region15: #{tpu_custom_call.1} parent=1 // pred_check_branch
      %40 = sbr.rel (0) target = $region17
    $region16: #{tpu_custom_call.1} parent=1 // pred_region
      %42 = dma.done [#allocation3], 256
    $region17: #{tpu_custom_call.1} parent=1 // pred_fallthru
      _
    // Predicated region
    $region18: #{tpu_custom_call.1} parent=1 // pred_check
      _
    $region19: #{tpu_custom_call.1} parent=1 // pred_check_branch
      %44 = sbr.rel (0) target = $region21
    $region20: #{tpu_custom_call.1} parent=1 // pred_region
      %46 = dma.done [#allocation6], 256
    $region21: #{tpu_custom_call.1} parent=1 // pred_fallthru
      _
    %v48 = vld [vmem:[#allocation2] sm:$0xf]
    %v49 = vld [vmem:[#allocation2 + $0x4] sm:$0xf]
    %v50 = vld [vmem:[#allocation2 + $0x8] sm:$0xf]
    %v51 = vld [vmem:[#allocation2 + $0xc] sm:$0xf]
    %v52 = vld [vmem:[#allocation5] sm:$0xf]
    %v53 = vld [vmem:[#allocation5 + $0x4] sm:$0xf]
    %v54 = vld [vmem:[#allocation5 + $0x8] sm:$0xf]
    %v55 = vld [vmem:[#allocation5 + $0xc] sm:$0xf]
    %v56 = vld [vmem:[%s2] sm:$0x1]
    %v58 = vperm.slane %v56, 0
    %v64 = vunpack.c.l.b16 %v48
    %v65 = vunpack.c.l.b16 %v49
    %v66 = vunpack.c.l.b16 %v50
    %v67 = vunpack.c.l.b16 %v51
    %v68 = vpack.c.b16 %v65, %v64
    %v69 = vpack.c.b16 %v67, %v66
    %v74 = vunpack.c.l.b16 %v52
    %v75 = vunpack.c.l.b16 %v53
    %v76 = vunpack.c.l.b16 %v54
    %v77 = vunpack.c.l.b16 %v55
    %v78 = vpack.c.b16 %v75, %v74
    %v79 = vpack.c.b16 %v77, %v76
    %vm82 = vcmask 261120
    %v84 = vsel %vm82, %v68, 0
    %v87 = vsel %vm82, %v69, 0
    %89 = vmatpush.bf16.msra.mxu0 0
    %90 = vmatpush.bf16.msra.mxu0 0
    %91 = vmatpush.bf16.msra.mxu0 0
    %92 = vmatpush.bf16.msra.mxu0 0
    %93 = vmatpush.bf16.msra.mxu0 0
    %94 = vmatpush.bf16.msra.mxu0 0
    %95 = vmatpush.bf16.msra.mxu0 %v79
    %96 = vmatpush.bf16.msra.mxu0 %v78
    %97 = vmatmul.bf16.gmra.mxu0 %v84
    %v98 = vpop.f32.mrf.mxu0
    %v99 = vadd.f32 %v58, %v98
    %v100 = vpop.f32.mrf.mxu0
    %v101 = vadd.f32 %v58, %v100
    %102 = vmatmul.bf16.gmra.mxu0 %v87
    %v103 = vpop.f32.mrf.mxu0
    %v104 = vadd.f32 %v58, %v103
    %v105 = vpop.f32.mrf.mxu0
    %v106 = vadd.f32 %v58, %v105
    %107 = vdwg.mxu0
    %v108 = vpack.c.bf16 %v99, %v99
    %v109 = vpack.c.bf16 %v101, %v101
    %v110 = vpack.c.bf16 %v104, %v104
    %v111 = vpack.c.bf16 %v106, %v106
    %vm112 = vcmask 781312
    %113 = vst.msk [vmem:[#allocation7] sm:$0xf] %vm112, %v108
    %114 = vst.msk [vmem:[#allocation7 + $0x4] sm:$0xf] %vm112, %v109
    %115 = vst.msk [vmem:[#allocation7 + $0x8] sm:$0xf] %vm112, %v110
    %116 = vst.msk [vmem:[#allocation7 + $0xc] sm:$0xf] %vm112, %v111
    // Predicated region
    $region22: #{tpu_custom_call.1} parent=1 // pred_check
      _
    $region23: #{tpu_custom_call.1} parent=1 // pred_check_branch
      %118 = sbr.rel (0) target = $region25
    $region24: #{tpu_custom_call.1} parent=1 // pred_region
      %120 = vsyncadd [#allocation4], 0
      %s121 = sshll.u32 [#allocation7], 4
      %s122 = int_to_ptr.vmem [resolvable:$true] %s121
      %s123 = sshll.u32 %s3, 4
      %s124 = int_to_ptr.hbm [resolvable:$true] %s123
      %129 = dma.vmem_to_hbm [thread:$0]  %s122, 256, %s124, [#allocation4], 64, 64, 4
    $region25: #{tpu_custom_call.1} parent=1 // pred_fallthru
      _
    // Predicated region
    $region26: #{tpu_custom_call.1} parent=1 // pred_check
      _
    $region27: #{tpu_custom_call.1} parent=1 // pred_check_branch
      %131 = sbr.rel (0) target = $region29
    $region28: #{tpu_custom_call.1} parent=1 // pred_region
      %133 = dma.done [#allocation4], 256
    $region29: #{tpu_custom_call.1} parent=1 // pred_fallthru
      _
    %134 = vsyncpa [#allocation3], 1
    %135 = vsyncpa [#allocation6], 1
    %136 = vsyncpa [#allocation4], 1

</llo_original>
